<compile_context>
chip_gen: v6e
topology: v6e:2x2x1
jax: 0.10.0
libtpu: 0.0.40
codegen_flags: <defaults>
</compile_context>

<pallas_src>
import math

import jax
import jax.numpy as jnp
from jax.experimental import pallas as pl
from jax.experimental.pallas import tpu as pltpu


def _patch_embed_kernel(x_ref, w_ref, b_ref, o_ref):
    # x_ref: (tm_p, G*K), w_ref: (G*K, G*D), b_ref: (1, G*D), o_ref: (tm_p, G*D)
    acc = jnp.dot(x_ref[...], w_ref[...], preferred_element_type=jnp.float32)
    o_ref[...] = (acc + b_ref[...]).astype(o_ref.dtype)


def patch_embedding(x, weight, bias, patch_size, *, compute_dtype=None,
                    tile_rows=8192):
    """
    Args:
      x:             [B, N, C, P*L]  float32
      weight:        [D, C, L, 1]    (Conv2d weight layout)
      bias:          [D]
      patch_size:    L
      compute_dtype: optional (e.g. jnp.bfloat16 on v6e/v7x) dtype for the
                     MXU inputs; accumulation stays f32.  Default: keep input
                     dtype (matches PyTorch f32 semantics).
      tile_rows:     target unpacked output rows per grid step.
    Returns:
      [B, N, D, P]
    """
    B, N, C, T = x.shape
    L = patch_size
    assert T % L == 0
    P = T // L
    D = weight.shape[0]
    out_dtype = x.dtype

    M = B * N * P
    K = C * L

    # ---- patch extraction (free reshape when C == 1, the TSFormer case) ----
    if C == 1:
        x_flat = x.reshape(M, K)
    else:
        # feature order (c, l) to match weight.reshape(D, C*L)
        x_flat = x.reshape(B, N, C, P, L).transpose(0, 1, 3, 2, 4).reshape(M, K)

    w_flat = weight.reshape(D, C * L).T          # [K, D]

    # ---- packing factor G: make the output lane width a multiple of 128 ----
    g = 128 // math.gcd(D, 128)
    if g > 8:          # cap the block-diagonal weight blow-up; fall back to D-wide
        g = 1

    # ---- tile size / padding (ragged M handled by padding, not assert) ----
    num_tiles = (M + tile_rows - 1) // tile_rows
    tm = (M + num_tiles - 1) // num_tiles        # unpacked rows per tile
    tm = ((tm + 8 * g - 1) // (8 * g)) * (8 * g)  # multiple of 8*G (sublane + pack)
    M_pad = tm * num_tiles
    if M_pad > M:
        x_flat = jnp.pad(x_flat, ((0, M_pad - M), (0, 0)))

    Mp, tmp = M_pad // g, tm // g                # packed rows
    Kp, Dp = g * K, g * D

    x_pk = x_flat.reshape(Mp, Kp)                # free row-major reshape
    if g > 1:
        w_pk = jnp.kron(jnp.eye(g, dtype=w_flat.dtype), w_flat)   # [G*K, G*D]
        b_pk = jnp.tile(bias, g).reshape(1, Dp)
    else:
        w_pk = w_flat
        b_pk = bias.reshape(1, D)
    b_pk = b_pk.astype(jnp.float32)

    if compute_dtype is not None:                # e.g. bf16 on v6e / v7x
        x_pk = x_pk.astype(compute_dtype)
        w_pk = w_pk.astype(compute_dtype)

    in_bytes = jnp.dtype(x_pk.dtype).itemsize
    cost = pl.CostEstimate(
        flops=2 * Mp * Kp * Dp,
        bytes_accessed=(Mp * Kp + Kp * Dp) * in_bytes
        + Mp * Dp * jnp.dtype(out_dtype).itemsize,
        transcendentals=0,
    )

    out_pk = pl.pallas_call(
        _patch_embed_kernel,
        out_shape=jax.ShapeDtypeStruct((Mp, Dp), out_dtype),
        grid_spec=pltpu.PrefetchScalarGridSpec(
            num_scalar_prefetch=0,
            grid=(num_tiles,),
            in_specs=[
                pl.BlockSpec((tmp, Kp), lambda i: (i, 0)),   # x tile
                pl.BlockSpec((Kp, Dp), lambda i: (0, 0)),    # packed weight
                pl.BlockSpec((1, Dp), lambda i: (0, 0)),     # packed bias
            ],
            out_specs=pl.BlockSpec((tmp, Dp), lambda i: (i, 0)),
        ),
        compiler_params=pltpu.CompilerParams(
            dimension_semantics=("parallel",)),
        cost_estimate=cost,
    )(x_pk, w_pk, b_pk)

    # unpack rows (free reshape), drop padding, restore module output layout.
    out_flat = out_pk.reshape(M_pad, D)[:M]
    out = out_flat.reshape(B, N, P, D).transpose(0, 1, 3, 2)   # [B, N, D, P]
    return out


def _reference(x, weight, bias, patch_size):
    """Pure-JAX reference mirroring the PyTorch forward (norm_layer=Identity)."""
    B, N, C, T = x.shape
    L = patch_size
    P = T // L
    x_p = x.reshape(B, N, C, P, L)
    out = jnp.einsum("bncpl,dcl->bndp", x_p, weight[..., 0])
    return out + bias[None, None, :, None]


if __name__ == "__main__":
    key = jax.random.PRNGKey(0)

    # --- test 1: TSFormer-style (C=1), packed lane-dense path (G=4) ---------
    B, N, C, L, P, D = 2, 4, 1, 4, 8, 32
    T = P * L
    k1, k2, k3, key = jax.random.split(key, 4)
    x = jax.random.normal(k1, (B, N, C, T), dtype=jnp.float32)
    weight = jax.random.normal(k2, (D, C, L, 1), dtype=jnp.float32) * 0.1
    bias = jax.random.normal(k3, (D,), dtype=jnp.float32) * 0.1

    out = jax.block_until_ready(patch_embedding(x, weight, bias, L))
    assert out.shape == (B, N, D, P), out.shape
    ref = _reference(x, weight, bias, L)
    assert jnp.allclose(out, ref, atol=1e-5, rtol=1e-5), float(
        jnp.max(jnp.abs(out - ref)))

    # --- test 2: C>1, ragged M, multi-tile grid with padding, G=1 fallback --
    B, N, C, L, P, D = 2, 3, 2, 4, 7, 24
    T = P * L
    k1, k2, k3, key = jax.random.split(key, 4)
    x = jax.random.normal(k1, (B, N, C, T), dtype=jnp.float32)
    weight = jax.random.normal(k2, (D, C, L, 1), dtype=jnp.float32) * 0.1
    bias = jax.random.normal(k3, (D,), dtype=jnp.float32) * 0.1

    out = jax.block_until_ready(
        patch_embedding(x, weight, bias, L, tile_rows=32))
    assert out.shape == (B, N, D, P), out.shape
    ref = _reference(x, weight, bias, L)
    assert jnp.allclose(out, ref, atol=1e-5, rtol=1e-5), float(
        jnp.max(jnp.abs(out - ref)))

    print("KERNEL_OK")
</pallas_src>

<mosaic_0001>
module attributes {stable_mosaic.version = 11 : i64} {
  func.func @_patch_embed_kernel(%arg0: i32, %arg1: memref<16x16xf32, #tpu.memory_space<vmem>>, %arg2: memref<16x128xf32, #tpu.memory_space<vmem>>, %arg3: memref<1x128xf32, #tpu.memory_space<vmem>>, %arg4: memref<16x128xf32, #tpu.memory_space<vmem>>) attributes {dimension_semantics = [#tpu.dimension_semantics<parallel>], iteration_bounds = array<i64: 1>, scalar_prefetch = 0 : i64, scratch_operands = 0 : i64, tpu.core_type = #tpu.core_type<tc>, window_params = [{transform_indices = @transform_0, window_bounds = array<i64: 16, 16>}, {pipeline_mode = #tpu.pipeline_mode<synchronous>, transform_indices = @transform_1, window_bounds = array<i64: 16, 128>}, {pipeline_mode = #tpu.pipeline_mode<synchronous>, transform_indices = @transform_2, window_bounds = array<i64: 1, 128>}, {transform_indices = @transform_3, window_bounds = array<i64: 16, 128>}]} {
    %c0 = arith.constant 0 : index
    %c0_0 = arith.constant 0 : index
    %0 = vector.load %arg1[%c0, %c0_0] : memref<16x16xf32, #tpu.memory_space<vmem>>, vector<16x16xf32>
    %c0_1 = arith.constant 0 : index
    %c0_2 = arith.constant 0 : index
    %1 = vector.load %arg2[%c0_1, %c0_2] : memref<16x128xf32, #tpu.memory_space<vmem>>, vector<16x128xf32>
    %cst = arith.constant dense<0.000000e+00> : vector<16x128xf32>
    %2 = tpu.matmul %0, %1, %cst {dimension_numbers = #tpu.dot_dimension_numbers<[1], [0], [0], [1], [0, 0, 1, 1], [], []>} : vector<16x16xf32>, vector<16x128xf32>, vector<16x128xf32> -> vector<16x128xf32>
    %c0_3 = arith.constant 0 : index
    %c0_4 = arith.constant 0 : index
    %3 = vector.load %arg3[%c0_3, %c0_4] : memref<1x128xf32, #tpu.memory_space<vmem>>, vector<1x128xf32>
    %4 = vector.broadcast %3 : vector<1x128xf32> to vector<16x128xf32>
    %5 = arith.addf %2, %4 : vector<16x128xf32>
    %c0_5 = arith.constant 0 : index
    %c0_6 = arith.constant 0 : index
    %6 = vector.load %arg4[%c0_5, %c0_6] : memref<16x128xf32, #tpu.memory_space<vmem>>, vector<16x128xf32>
    tpu.vector_store %arg4[%c0_5, %c0_6], %5 {strides = array<i32>} : memref<16x128xf32, #tpu.memory_space<vmem>>, vector<16x128xf32>,
    return
  }
  func.func @transform_0(%arg0: i32) -> (i32, i32) {
    %c0_i32 = arith.constant 0 : i32
    %c0_i32_0 = arith.constant 0 : i32
    return %arg0, %c0_i32 : i32, i32
  }
  func.func @transform_1(%arg0: i32) -> (i32, i32) {
    %c0_i32 = arith.constant 0 : i32
    %c0_i32_0 = arith.constant 0 : i32
    %c0_i32_1 = arith.constant 0 : i32
    return %c0_i32, %c0_i32_0 : i32, i32
  }
  func.func @transform_2(%arg0: i32) -> (i32, i32) {
    %c0_i32 = arith.constant 0 : i32
    %c0_i32_0 = arith.constant 0 : i32
    %c0_i32_1 = arith.constant 0 : i32
    return %c0_i32, %c0_i32_0 : i32, i32
  }
  func.func @transform_3(%arg0: i32) -> (i32, i32) {
    %c0_i32 = arith.constant 0 : i32
    %c0_i32_0 = arith.constant 0 : i32
    return %arg0, %c0_i32 : i32, i32
  }
}

</mosaic_0001>

<llo_original>
// kernel: tpu_custom_call.1
$region0: #{tpu_custom_call.1}
  #allocation0 [shape = 'u32[]', space=smem, size = 0x4, offset = 0x4, fixed_abs, tag = 'smem constant byte address 0x4 - core index']
  #allocation1 [shape = 'u32[144,128]{1,0:T(1,128)}', space=vmem, size = 0x12000, scoped, tag = 'internal scratch']
  %s0 = inlined_call_operand.hbm [shape: f32[16,16], index: 0, kind: input, shape index: {}]
  %s1 = inlined_call_operand.hbm [shape: f32[16,128], index: 1, kind: input, shape index: {}]
  %s2 = inlined_call_operand.vmem [shape: f32[1,128], index: 2, kind: input, shape index: {}]
  %s3 = inlined_call_operand.hbm [shape: f32[16,128], index: 3, kind: output, shape index: {}]
  %s4 = sld [smem:[#allocation0]]
  $region30: #{tpu_custom_call.1} parent=0
    _
  %s6 = ssub.s32 1, %s4
  %s7 = scalar_select 0, %s6, %s4
  $region1: #{tpu_custom_call.1} parent=0
    #allocation2 [shape = 'u8[8192]{0}', space=vmem, size = 0x2000, scoped, tag = 'input window, operand 0, single buffered']
    #allocation3 [shape = 's32[1]{0}', space=sflag, size = 0x4, scoped, tag = 'scoped memory for tpu_custom_call.1']
    #allocation4 [shape = 's32[1]{0}', space=sflag, size = 0x4, scoped, tag = 'scoped memory for tpu_custom_call.1']
    #allocation5 [shape = 'u8[8192]{0}', space=vmem, size = 0x2000, scoped, tag = 'input window, operand 1, single buffered']
    #allocation6 [shape = 's32[1]{0}', space=sflag, size = 0x4, scoped, tag = 'scoped memory for tpu_custom_call.1']
    #allocation7 [shape = 'u8[8192]{0}', space=vmem, size = 0x2000, scoped, tag = 'output window, operand 0, single buffered']
    %8 = vsyncpa [#allocation3], 0
    %9 = vsyncpa [#allocation6], 0
    %10 = vsyncpa [#allocation4], 0
    // Predicated region
    $region2: #{tpu_custom_call.1} parent=1 // pred_check
      _
    $region3: #{tpu_custom_call.1} parent=1 // pred_check_branch
      %12 = sbr.rel (0) target = $region5
    $region4: #{tpu_custom_call.1} parent=1 // pred_region
      %s14 = ssub.s32 256, 256
      %15 = vsyncadd [#allocation3], %s14
      %s16 = sshll.u32 [#allocation2], 4
      %s17 = int_to_ptr.vmem [resolvable:$true] %s16
      %22 = dma.hbm_to_vmem [thread:$0]  %s0, 256, %s17, [#allocation3], 128, 128, 8
    $region5: #{tpu_custom_call.1} parent=1 // pred_fallthru
      _
    // Predicated region
    $region6: #{tpu_custom_call.1} parent=1 // pred_check
      _
    $region7: #{tpu_custom_call.1} parent=1 // pred_check_branch
      %24 = sbr.rel (0) target = $region9
    $region8: #{tpu_custom_call.1} parent=1 // pred_region
      %s26 = ssub.s32 256, 256
      %27 = vsyncadd [#allocation6], %s26
      %s28 = sshll.u32 [#allocation5], 4
      %s29 = int_to_ptr.vmem [resolvable:$true] %s28
      %34 = dma.hbm_to_vmem [thread:$0]  %s1, 256, %s29, [#allocation6], 128, 128, 8
    $region9: #{tpu_custom_call.1} parent=1 // pred_fallthru
      _
    // Predicated region
    $region10: #{tpu_custom_call.1} parent=1 // pred_check
      _
    $region11: #{tpu_custom_call.1} parent=1 // pred_check_branch
      %36 = sbr.rel (0) target = $region13
    $region12: #{tpu_custom_call.1} parent=1 // pred_region
      _
    $region13: #{tpu_custom_call.1} parent=1 // pred_fallthru
      _
    // Predicated region
    $region14: #{tpu_custom_call.1} parent=1 // pred_check
      _
    $region15: #{tpu_custom_call.1} parent=1 // pred_check_branch
      %38 = sbr.rel (0) target = $region17
    $region16: #{tpu_custom_call.1} parent=1 // pred_region
      %39 = dma.done [#allocation3], 256
    $region17: #{tpu_custom_call.1} parent=1 // pred_fallthru
      _
    // Predicated region
    $region18: #{tpu_custom_call.1} parent=1 // pred_check
      _
    $region19: #{tpu_custom_call.1} parent=1 // pred_check_branch
      %41 = sbr.rel (0) target = $region21
    $region20: #{tpu_custom_call.1} parent=1 // pred_region
      %42 = dma.done [#allocation6], 256
    $region21: #{tpu_custom_call.1} parent=1 // pred_fallthru
      _
    %v43 = vld [vmem:[#allocation2] sm:$0xff]
    %v44 = vld [vmem:[#allocation2 + $0x8] sm:$0xff]
    %v45 = vld [vmem:[#allocation5] sm:$0xff]
    %v46 = vld [vmem:[#allocation5 + $0x8] sm:$0xff]
    %v47 = vld [vmem:[%s2] sm:$0x1]
    %v49 = vlaneseq
    %v50 = vshrl.u32 %v49, 7
    %v51 = vsub.s32 0, %v50
    %v52 = vrot.slane %v47, %v51
    %vm54 = vcmask 130048
    %v56 = vsel %vm54, %v43, 0
    %v59 = vsel %vm54, %v44, 0
    %61 = vmatprep.subr.mxu0 0.0
    %62 = vmatpush1.msra.mxu0 0.0
    %63 = vmatprep.subr.mxu0 0.0
    %64 = vmatpush1.msra.mxu0 0.0
    %65 = vmatprep.subr.mxu0 0.0
    %66 = vmatpush1.msra.mxu0 0.0
    %67 = vmatprep.subr.mxu0 0.0
    %68 = vmatpush1.msra.mxu0 0.0
    %69 = vmatprep.subr.mxu0 0.0
    %70 = vmatpush1.msra.mxu0 0.0
    %71 = vmatprep.subr.mxu0 0.0
    %72 = vmatpush1.msra.mxu0 0.0
    %73 = vmatprep.subr.mxu0 0.0
    %74 = vmatpush1.msra.mxu0 0.0
    %75 = vmatprep.subr.mxu0 0.0
    %76 = vmatpush1.msra.mxu0 0.0
    %77 = vmatprep.subr.mxu0 0.0
    %78 = vmatpush1.msra.mxu0 0.0
    %79 = vmatprep.subr.mxu0 0.0
    %80 = vmatpush1.msra.mxu0 0.0
    %81 = vmatprep.subr.mxu0 0.0
    %82 = vmatpush1.msra.mxu0 0.0
    %83 = vmatprep.subr.mxu0 0.0
    %84 = vmatpush1.msra.mxu0 0.0
    %85 = vmatprep.subr.mxu0 0.0
    %86 = vmatpush1.msra.mxu0 0.0
    %87 = vmatprep.subr.mxu0 0.0
    %88 = vmatpush1.msra.mxu0 0.0
    %89 = vmatprep.subr.mxu0 0.0
    %90 = vmatpush1.msra.mxu0 %v46
    %91 = vmatprep.subr.mxu0 0.0
    %92 = vmatpush1.msra.mxu0 %v45
    %93 = vmatprep.subr.mxu0 0.0
    %94 = vmatpush2.msra.mxu0 0.0
    %95 = vmatprep.subr.mxu0 0.0
    %96 = vmatpush2.msra.mxu0 0.0
    %97 = vmatprep.subr.mxu0 0.0
    %98 = vmatpush2.msra.mxu0 0.0
    %99 = vmatprep.subr.mxu0 0.0
    %100 = vmatpush2.msra.mxu0 0.0
    %101 = vmatprep.subr.mxu0 0.0
    %102 = vmatpush2.msra.mxu0 0.0
    %103 = vmatprep.subr.mxu0 0.0
    %104 = vmatpush2.msra.mxu0 0.0
    %105 = vmatprep.subr.mxu0 0.0
    %106 = vmatpush2.msra.mxu0 0.0
    %107 = vmatprep.subr.mxu0 0.0
    %108 = vmatpush2.msra.mxu0 0.0
    %109 = vmatprep.subr.mxu0 0.0
    %110 = vmatpush2.msra.mxu0 0.0
    %111 = vmatprep.subr.mxu0 0.0
    %112 = vmatpush2.msra.mxu0 0.0
    %113 = vmatprep.subr.mxu0 0.0
    %114 = vmatpush2.msra.mxu0 0.0
    %115 = vmatprep.subr.mxu0 0.0
    %116 = vmatpush2.msra.mxu0 0.0
    %117 = vmatprep.subr.mxu0 0.0
    %118 = vmatpush2.msra.mxu0 0.0
    %119 = vmatprep.subr.mxu0 0.0
    %120 = vmatpush2.msra.mxu0 0.0
    %121 = vmatprep.subr.mxu0 0.0
    %122 = vmatpush2.msra.mxu0 0.0
    %123 = vmatprep.subr.mxu0 0.0
    %124 = vmatpush2.msra.mxu0 0.0
    %125 = vmatprep.mubr.f32.mxu0 0.0
    %126 = vmatmul.mubr.f32.gmra.mxu0 %v56
    %v127 = vpop.f32.mrf.mxu0
    %v128 = vadd.f32 %v52, %v127
    %v129 = vpop.f32.mrf.mxu0
    %130 = vmatprep.mubr.f32.mxu0 0.0
    %131 = vmatmul.mubr.f32.gmra.mxu0 %v59
    %v132 = vpop.f32.mrf.mxu0
    %v133 = vadd.f32 %v52, %v132
    %v134 = vpop.f32.mrf.mxu0
    %135 = vdwg.mxu0
    %136 = vst [vmem:[#allocation7] sm:$0xff] %v128
    %137 = vst [vmem:[#allocation7 + $0x8] sm:$0xff] %v133
    // Predicated region
    $region22: #{tpu_custom_call.1} parent=1 // pred_check
      _
    $region23: #{tpu_custom_call.1} parent=1 // pred_check_branch
      %139 = sbr.rel (0) target = $region25
    $region24: #{tpu_custom_call.1} parent=1 // pred_region
      %s141 = ssub.s32 256, 256
      %142 = vsyncadd [#allocation4], %s141
      %s143 = sshll.u32 [#allocation7], 4
      %s144 = int_to_ptr.vmem [resolvable:$true] %s143
      %149 = dma.vmem_to_hbm [thread:$0]  %s144, 256, %s3, [#allocation4], 128, 128, 8
    $region25: #{tpu_custom_call.1} parent=1 // pred_fallthru
      _
    // Predicated region
    $region26: #{tpu_custom_call.1} parent=1 // pred_check
      _
    $region27: #{tpu_custom_call.1} parent=1 // pred_check_branch
      %151 = sbr.rel (0) target = $region29
    $region28: #{tpu_custom_call.1} parent=1 // pred_region
      %152 = dma.done [#allocation4], 256
    $region29: #{tpu_custom_call.1} parent=1 // pred_fallthru
      _
    %153 = vsyncpa [#allocation3], 1
    %154 = vsyncpa [#allocation6], 1
    %155 = vsyncpa [#allocation4], 1

</llo_original>
